<compile_context>
chip_gen: v6e
topology: v6e:2x2x1
jax: 0.10.0
libtpu: 0.0.40
codegen_flags: <defaults>
</compile_context>

<pallas_src>
import functools
import math

import jax
import jax.numpy as jnp
from jax.experimental import pallas as pl
from jax.experimental.pallas import tpu as pltpu


def _round_up(x, m):
    return ((x + m - 1) // m) * m


def _activation(name, x):
    if name == 'ReLU':
        return jnp.maximum(x, 0.0)
    elif name == 'LeakyReLU':
        # torch.nn.LeakyReLU default negative_slope = 0.01
        return jnp.where(x >= 0.0, x, 0.01 * x)
    elif name in ('None', None):
        return x
    else:
        # TODO(synk): Snake / SnakeAlt activations are referenced but not defined
        # in the provided source, so they cannot be reproduced here.
        raise NotImplementedError(f"activation '{name}' not implemented")


def _mlp_kernel(*refs, num_layers, activation, output_activation):
    # refs = (xT_ref, w0_ref, ..., w{L-1}_ref, oT_ref)
    xT_ref = refs[0]
    w_refs = refs[1:1 + num_layers]
    oT_ref = refs[1 + num_layers]

    # Batch on lanes, features on sublanes.  Cast to f32 *inside* the kernel
    # (matches `if x.dtype != torch.float: x = x.float()`), so the HBM->VMEM DMA
    # moved x in its native dtype.
    h = xT_ref[...].astype(jnp.float32)                       # [d_in_pad, tile_n]
    for i in range(num_layers):
        # Torch Linear weight is (out, in); with batch-on-lanes the layer is
        # simply h_T <- W @ h_T (MXU matmul, f32 accumulation), no transposes.
        h = jnp.dot(w_refs[i][...], h, preferred_element_type=jnp.float32)
        if i != num_layers - 1:
            h = _activation(activation, h)
        elif output_activation not in ('None', None):
            h = _activation(output_activation, h)
    oT_ref[...] = h.astype(oT_ref.dtype)                      # lane-dense store


def pytorch_mlp_forward(x, torch_weights, config, *, tile_n=512):
    """Forward pass of PytorchMLP.

    x:             [N, num_input_dims], any float dtype (cast to f32 in-kernel).
    torch_weights: list of arrays in torch nn.Linear layout, W_i of shape (out_i, in_i).
    config:        dict with 'n_neurons', 'n_hidden_layers', 'activation',
                   optional 'output_activation'.
    Returns:       [N, num_output_dims] float32 (torch-style layout).
    """
    activation = config['activation']
    output_activation = config.get('output_activation', 'None')

    # Keep torch (out, in) layout — no transpose needed with batch-on-lanes.
    ws = [jnp.asarray(w, jnp.float32) for w in torch_weights]
    num_layers = len(ws)

    x = jnp.asarray(x)              # native dtype; f32 cast happens in-kernel
    N, d_in = x.shape
    d_out = ws[-1].shape[0]
    assert ws[0].shape[1] == d_in

    # Pad feature dims (sublane axis in this layout) to multiples of 8 with zeros.
    # Padded weight rows/cols are zero, so results are unchanged; the real d_out
    # rows are sliced off at the end.
    in_pads = [_round_up(w.shape[1], 8) for w in ws]
    out_pads = [_round_up(w.shape[0], 8) for w in ws]
    ws_p = [
        jnp.pad(w, ((0, out_pads[i] - w.shape[0]), (0, in_pads[i] - w.shape[1])))
        for i, w in enumerate(ws)
    ]
    d_in_p = in_pads[0]
    d_out_p = out_pads[-1]

    # Batch tile: lane-dense multiple of 128; pad N up to the tile so any batch
    # size works.  (For large N, tile_n=512 keeps the grid multi-step so the
    # 'parallel' axis can shard across v7x's two TensorCores.)
    tile_n = max(128, 128 * (tile_n // 128))
    if N <= tile_n:
        tile_n = _round_up(N, 128)              # single tile, no over-padding
    n_pad = _round_up(N, tile_n)
    x_t = jnp.pad(x.T, ((0, d_in_p - d_in), (0, n_pad - N)))   # [d_in_pad, n_pad]

    grid = (n_pad // tile_n,)

    # --- VMEM budget for the fully-resident-weight design -------------------
    # Weights are (by default) double-buffered even though their index_map is
    # constant (Pallas only DMAs them once); x/out tiles are double-buffered;
    # hidden activations live in vregs/VMEM per tile.
    itemsize = jnp.dtype(x.dtype).itemsize
    w_bytes = 2 * sum(int(w.shape[0]) * int(w.shape[1]) * 4 for w in ws_p)
    io_bytes = 2 * (d_in_p * tile_n * itemsize + d_out_p * tile_n * 4)
    hid_bytes = 2 * max(out_pads) * tile_n * 4
    vmem_est = w_bytes + io_bytes + hid_bytes
    # Keep well inside v7x's 64 MiB physical VMEM; larger configs should tile
    # the hidden dimension / layers instead of assuming residency.
    assert vmem_est < 48 * 1024 * 1024, (
        f"MLP too large for fully-resident-weight kernel (~{vmem_est} B VMEM); "
        "tile the hidden dimension / layers instead")
    cp_kwargs = dict(dimension_semantics=("parallel",))
    if vmem_est > 12 * 1024 * 1024:             # v5e scoped default is 16 MiB
        cp_kwargs["vmem_limit_bytes"] = min(2 * vmem_est, 100 * 1024 * 1024)

    kernel = functools.partial(
        _mlp_kernel,
        num_layers=num_layers,
        activation=activation,
        output_activation=output_activation,
    )

    in_specs = [pl.BlockSpec((d_in_p, tile_n), lambda i: (0, i))]
    for w in ws_p:
        # Constant index_map -> Pallas fetches each weight once and keeps it
        # VMEM-resident across all batch tiles (no per-step DMA).
        in_specs.append(pl.BlockSpec(w.shape, lambda i: (0, 0)))
    out_specs = pl.BlockSpec((d_out_p, tile_n), lambda i: (0, i))

    out_t = pl.pallas_call(
        kernel,
        out_shape=jax.ShapeDtypeStruct((d_out_p, n_pad), jnp.float32),
        grid_spec=pltpu.PrefetchScalarGridSpec(
            num_scalar_prefetch=0,
            grid=grid,
            in_specs=in_specs,
            out_specs=out_specs,
        ),
        compiler_params=pltpu.CompilerParams(**cp_kwargs),
    )(x_t, *ws_p)

    # Layout plumbing back to the torch-style [N, d_out] and drop padding.
    return out_t[:d_out, :N].T


# ----------------------------- test harness ---------------------------------

def _init_torch_linear_weight(key, out_dim, in_dim):
    # Deterministic stand-in for torch's kaiming-uniform init:
    # U(-1/sqrt(in_dim), 1/sqrt(in_dim)), shape (out, in).
    bound = 1.0 / math.sqrt(in_dim)
    return jax.random.uniform(key, (out_dim, in_dim), jnp.float32,
                              minval=-bound, maxval=bound)


def _reference_mlp(x, torch_weights, config):
    activation = config['activation']
    output_activation = config.get('output_activation', 'None')
    h = jnp.asarray(x, jnp.float32)
    L = len(torch_weights)
    for i, w in enumerate(torch_weights):
        h = h @ jnp.asarray(w, jnp.float32).T
        if i != L - 1:
            h = _activation(activation, h)
        elif output_activation not in ('None', None):
            h = _activation(output_activation, h)
    return h


if __name__ == "__main__":
    # Small config consistent with the module's __init__.
    num_input_dims = 4
    num_output_dims = 3
    config = {
        'n_neurons': 32,
        'n_hidden_layers': 2,
        'activation': 'ReLU',
        # no 'output_activation' -> identity output, as in the module
    }

    key = jax.random.PRNGKey(0)
    k_x, *k_ws = jax.random.split(key, 1 + config['n_hidden_layers'] + 1)

    # Torch-layout weights: Linear(in0->h), Linear(h->h), Linear(h->out).
    dims = [num_input_dims] + [config['n_neurons']] * config['n_hidden_layers'] + [num_output_dims]
    weights = [
        _init_torch_linear_weight(k_ws[i], dims[i + 1], dims[i])
        for i in range(len(dims) - 1)
    ]

    # Batch of points; tile_n=512 -> 4 grid steps (shardable across 2 TCs on v7x).
    N = 2048
    x = jax.random.normal(k_x, (N, num_input_dims), jnp.float32)

    out = jax.block_until_ready(pytorch_mlp_forward(x, weights, config))
    ref = _reference_mlp(x, weights, config)
    assert out.shape == (N, num_output_dims)
    assert jnp.allclose(out, ref, atol=1e-5, rtol=1e-5), "mismatch vs pure-JAX reference (f32)"

    # Exercise the native-dtype input path: bf16 x is DMA'd as-is and cast to f32
    # inside the kernel (matching torch's `x.float()`).
    x_bf16 = x.astype(jnp.bfloat16)
    out_bf = jax.block_until_ready(pytorch_mlp_forward(x_bf16, weights, config))
    ref_bf = _reference_mlp(x_bf16, weights, config)
    assert jnp.allclose(out_bf, ref_bf, atol=1e-4, rtol=1e-4), "mismatch vs pure-JAX reference (bf16)"

    # Non-multiple-of-tile batch (exercises the padding path).
    x_odd = x[:300]
    out_odd = jax.block_until_ready(pytorch_mlp_forward(x_odd, weights, config))
    assert out_odd.shape == (300, num_output_dims)
    assert jnp.allclose(out_odd, ref[:300], atol=1e-5, rtol=1e-5), "mismatch on ragged batch"

    print("KERNEL_OK")
</pallas_src>

<mosaic_0001>
module attributes {stable_mosaic.version = 11 : i64} {
  func.func @_mlp_kernel(%arg0: i32, %arg1: memref<8x512xf32, #tpu.memory_space<vmem>>, %arg2: memref<32x8xf32, #tpu.memory_space<vmem>>, %arg3: memref<32x32xf32, #tpu.memory_space<vmem>>, %arg4: memref<8x32xf32, #tpu.memory_space<vmem>>, %arg5: memref<8x512xf32, #tpu.memory_space<vmem>>) attributes {dimension_semantics = [#tpu.dimension_semantics<parallel>], iteration_bounds = array<i64: 4>, scalar_prefetch = 0 : i64, scratch_operands = 0 : i64, tpu.core_type = #tpu.core_type<tc>, window_params = [{transform_indices = @transform_0, window_bounds = array<i64: 8, 512>}, {pipeline_mode = #tpu.pipeline_mode<synchronous>, transform_indices = @transform_1, window_bounds = array<i64: 32, 8>}, {pipeline_mode = #tpu.pipeline_mode<synchronous>, transform_indices = @transform_2, window_bounds = array<i64: 32, 32>}, {pipeline_mode = #tpu.pipeline_mode<synchronous>, transform_indices = @transform_3, window_bounds = array<i64: 8, 32>}, {transform_indices = @transform_4, window_bounds = array<i64: 8, 512>}]} {
    %c0 = arith.constant 0 : index
    %c0_0 = arith.constant 0 : index
    %0 = vector.load %arg1[%c0, %c0_0] : memref<8x512xf32, #tpu.memory_space<vmem>>, vector<8x512xf32>
    %c0_1 = arith.constant 0 : index
    %c0_2 = arith.constant 0 : index
    %1 = vector.load %arg2[%c0_1, %c0_2] : memref<32x8xf32, #tpu.memory_space<vmem>>, vector<32x8xf32>
    %cst = arith.constant dense<0.000000e+00> : vector<32x512xf32>
    %2 = tpu.matmul %1, %0, %cst {dimension_numbers = #tpu.dot_dimension_numbers<[1], [0], [0], [1], [0, 0, 1, 1], [], []>} : vector<32x8xf32>, vector<8x512xf32>, vector<32x512xf32> -> vector<32x512xf32>
    %cst_3 = arith.constant 0.000000e+00 : f32
    %3 = vector.broadcast %cst_3 : f32 to vector<32x512xf32>
    %4 = arith.maximumf %2, %3 : vector<32x512xf32>
    %c0_4 = arith.constant 0 : index
    %c0_5 = arith.constant 0 : index
    %5 = vector.load %arg3[%c0_4, %c0_5] : memref<32x32xf32, #tpu.memory_space<vmem>>, vector<32x32xf32>
    %cst_6 = arith.constant dense<0.000000e+00> : vector<32x512xf32>
    %6 = tpu.matmul %5, %4, %cst_6 {dimension_numbers = #tpu.dot_dimension_numbers<[1], [0], [0], [1], [0, 0, 1, 1], [], []>} : vector<32x32xf32>, vector<32x512xf32>, vector<32x512xf32> -> vector<32x512xf32>
    %cst_7 = arith.constant 0.000000e+00 : f32
    %7 = vector.broadcast %cst_7 : f32 to vector<32x512xf32>
    %8 = arith.maximumf %6, %7 : vector<32x512xf32>
    %c0_8 = arith.constant 0 : index
    %c0_9 = arith.constant 0 : index
    %9 = vector.load %arg4[%c0_8, %c0_9] : memref<8x32xf32, #tpu.memory_space<vmem>>, vector<8x32xf32>
    %cst_10 = arith.constant dense<0.000000e+00> : vector<8x512xf32>
    %10 = tpu.matmul %9, %8, %cst_10 {dimension_numbers = #tpu.dot_dimension_numbers<[1], [0], [0], [1], [0, 0, 1, 1], [], []>} : vector<8x32xf32>, vector<32x512xf32>, vector<8x512xf32> -> vector<8x512xf32>
    %c0_11 = arith.constant 0 : index
    %c0_12 = arith.constant 0 : index
    %11 = vector.load %arg5[%c0_11, %c0_12] : memref<8x512xf32, #tpu.memory_space<vmem>>, vector<8x512xf32>
    tpu.vector_store %arg5[%c0_11, %c0_12], %10 {strides = array<i32>} : memref<8x512xf32, #tpu.memory_space<vmem>>, vector<8x512xf32>,
    return
  }
  func.func @transform_0(%arg0: i32) -> (i32, i32) {
    %c0_i32 = arith.constant 0 : i32
    %c0_i32_0 = arith.constant 0 : i32
    return %c0_i32, %arg0 : i32, i32
  }
  func.func @transform_1(%arg0: i32) -> (i32, i32) {
    %c0_i32 = arith.constant 0 : i32
    %c0_i32_0 = arith.constant 0 : i32
    %c0_i32_1 = arith.constant 0 : i32
    return %c0_i32, %c0_i32_0 : i32, i32
  }
  func.func @transform_2(%arg0: i32) -> (i32, i32) {
    %c0_i32 = arith.constant 0 : i32
    %c0_i32_0 = arith.constant 0 : i32
    %c0_i32_1 = arith.constant 0 : i32
    return %c0_i32, %c0_i32_0 : i32, i32
  }
  func.func @transform_3(%arg0: i32) -> (i32, i32) {
    %c0_i32 = arith.constant 0 : i32
    %c0_i32_0 = arith.constant 0 : i32
    %c0_i32_1 = arith.constant 0 : i32
    return %c0_i32, %c0_i32_0 : i32, i32
  }
  func.func @transform_4(%arg0: i32) -> (i32, i32) {
    %c0_i32 = arith.constant 0 : i32
    %c0_i32_0 = arith.constant 0 : i32
    return %c0_i32, %arg0 : i32, i32
  }
}

</mosaic_0001>

<llo_original>
// kernel: tpu_custom_call.1
$region0: #{tpu_custom_call.1}
  #allocation0 [shape = 'u32[]', space=smem, size = 0x4, offset = 0x4, fixed_abs, tag = 'smem constant byte address 0x4 - core index']
  #allocation1 [shape = 'u32[144,128]{1,0:T(1,128)}', space=vmem, size = 0x12000, scoped, tag = 'internal scratch']
  %s0 = inlined_call_operand.hbm [shape: f32[8,2048], index: 0, kind: input, shape index: {}]
  %s1 = inlined_call_operand.vmem [shape: f32[32,8], index: 1, kind: input, shape index: {}]
  %s2 = inlined_call_operand.vmem [shape: f32[32,32], index: 2, kind: input, shape index: {}]
  %s3 = inlined_call_operand.vmem [shape: f32[8,32], index: 3, kind: input, shape index: {}]
  %s4 = inlined_call_operand.hbm [shape: f32[8,2048], index: 4, kind: output, shape index: {}]
  %s5 = sld [smem:[#allocation0]]
  $region53: #{tpu_custom_call.1} parent=0
    _
  %s7 = ssub.s32 1, %s5
  %s8 = scalar_select 0, %s7, %s5
  $region1: #{tpu_custom_call.1} parent=0
    #allocation2 [shape = 'u8[32768]{0}', space=vmem, size = 0x8000, scoped, tag = 'input window, operand 0']
    #allocation3 [shape = 's32[2]{0}', space=sflag, size = 0x8, scoped, tag = 'scoped memory for tpu_custom_call.1']
    #allocation4 [shape = 's32[2]{0}', space=sflag, size = 0x8, scoped, tag = 'scoped memory for tpu_custom_call.1']
    #allocation5 [shape = 'u8[32768]{0}', space=vmem, size = 0x8000, scoped, tag = 'output window, operand 0']
    %9 = vsyncpa [#allocation3], 0
    %s10 = scalar_lea.sflag [#allocation3], 1
    %11 = vsyncpa %s10, 0
    %12 = vsyncpa [#allocation4], 0
    %s13 = scalar_lea.sflag [#allocation4], 1
    %14 = vsyncpa %s13, 0
    loop: start=0, step=1, limit=6
    $region2: #{tpu_custom_call.1} parent=1 // loop_pre_header
      _
    $region3: #{tpu_custom_call.1} parent=1 // loop_header
      %s16 = sphi 0, %s20
      %p17 = scmp.ge.s32.totalorder %s16, 6
      %s26 = sphi 0, %s28
      %s29 = sphi 0, %s26
      %s30 = sphi 0, %s29
      %s46 = sphi 0, %s30
      %s50 = sphi 0, %s50
      %s52 = sphi 0, %s50
      %s53 = sphi 0, %s52
      %s67 = sphi 0, %s53
      %s71 = sphi 0, %s71
      %s73 = sphi 0, %s71
      %s74 = sphi 0, %s73
      %s88 = sphi 0, %s74
      %s92 = sphi 0, %s92
      %s94 = sphi 0, %s92
      %s95 = sphi 0, %s94
      %s109 = sphi 0, %s95
      %s115 = sphi 0, %s117
      %s118 = sphi 0, %s115
      %s119 = sphi 0, %s118
      %s135 = sphi 0, %s119
    $region4: #{tpu_custom_call.1} parent=1 // loop_header_branch
      %19 = sbr.rel (%p17) target = $region8
    $region5: #{tpu_custom_call.1} parent=1 // loop_body
      %s21 = ssub.s32 %s16, 1
      %s22 = ssub.s32 %s16, 2
      %s23 = sadd.s32 %s16, 1
      %s24 = ssub.s32 %s16, %s23
      %p25 = scmp.eq.s32.totalorder %s24, 0
      %s27 = sadd.s32 %s26, 1
      %s28 = scalar_select %p25, %s26, %s27
      %p31 = pneg %p25
      %p32 = scmp.eq.s32.totalorder %s16, 3
      %p33 = por %p31, %p32
      %p34 = scmp.ne.s32.totalorder %s26, %s29
      %p35 = scmp.eq.s32.totalorder %s16, 0
      %p36 = por %p34, %p35
      %p37 = scmp.ne.s32.totalorder %s26, %s29
      %p38 = scmp.eq.s32.totalorder %s21, 3
      %p39 = por %p37, %p38
      %p40 = scmp.ne.s32.totalorder %s29, %s30
      %p41 = scmp.eq.s32.totalorder %s21, 0
      %p42 = por %p40, %p41
      %p43 = scmp.ne.s32.totalorder %s29, %s30
      %p44 = scmp.eq.s32.totalorder %s22, 3
      %p45 = por %p43, %p44
      %p47 = scmp.ne.s32.totalorder %s30, %s46
      %p48 = scmp.eq.s32.totalorder %s22, 0
      %p49 = por %p47, %p48
      %s51 = sadd.s32 %s50, 1
      %p54 = scmp.eq.s32.totalorder %s16, 3
      %p55 = scmp.ne.s32.totalorder %s50, %s52
      %p56 = scmp.eq.s32.totalorder %s16, 0
      %p57 = por %p55, %p56
      %p58 = scmp.ne.s32.totalorder %s50, %s52
      %p59 = scmp.eq.s32.totalorder %s21, 3
      %p60 = por %p58, %p59
      %p61 = scmp.ne.s32.totalorder %s52, %s53
      %p62 = scmp.eq.s32.totalorder %s21, 0
      %p63 = por %p61, %p62
      %p64 = scmp.ne.s32.totalorder %s52, %s53
      %p65 = scmp.eq.s32.totalorder %s22, 3
      %p66 = por %p64, %p65
      %p68 = scmp.ne.s32.totalorder %s53, %s67
      %p69 = scmp.eq.s32.totalorder %s22, 0
      %p70 = por %p68, %p69
      %s72 = sadd.s32 %s71, 1
      %p75 = scmp.eq.s32.totalorder %s16, 3
      %p76 = scmp.ne.s32.totalorder %s71, %s73
      %p77 = scmp.eq.s32.totalorder %s16, 0
      %p78 = por %p76, %p77
      %p79 = scmp.ne.s32.totalorder %s71, %s73
      %p80 = scmp.eq.s32.totalorder %s21, 3
      %p81 = por %p79, %p80
      %p82 = scmp.ne.s32.totalorder %s73, %s74
      %p83 = scmp.eq.s32.totalorder %s21, 0
      %p84 = por %p82, %p83
      %p85 = scmp.ne.s32.totalorder %s73, %s74
      %p86 = scmp.eq.s32.totalorder %s22, 3
      %p87 = por %p85, %p86
      %p89 = scmp.ne.s32.totalorder %s74, %s88
      %p90 = scmp.eq.s32.totalorder %s22, 0
      %p91 = por %p89, %p90
      %s93 = sadd.s32 %s92, 1
      %p96 = scmp.eq.s32.totalorder %s16, 3
      %p97 = scmp.ne.s32.totalorder %s92, %s94
      %p98 = scmp.eq.s32.totalorder %s16, 0
      %p99 = por %p97, %p98
      %p100 = scmp.ne.s32.totalorder %s92, %s94
      %p101 = scmp.eq.s32.totalorder %s21, 3
      %p102 = por %p100, %p101
      %p103 = scmp.ne.s32.totalorder %s94, %s95
      %p104 = scmp.eq.s32.totalorder %s21, 0
      %p105 = por %p103, %p104
      %p106 = scmp.ne.s32.totalorder %s94, %s95
      %p107 = scmp.eq.s32.totalorder %s22, 3
      %p108 = por %p106, %p107
      %p110 = scmp.ne.s32.totalorder %s95, %s109
      %p111 = scmp.eq.s32.totalorder %s22, 0
      %p112 = por %p110, %p111
      %s113 = ssub.s32 %s16, %s23
      %p114 = scmp.eq.s32.totalorder %s113, 0
      %s116 = sadd.s32 %s115, 1
      %s117 = scalar_select %p114, %s115, %s116
      %p120 = pneg %p114
      %p121 = scmp.eq.s32.totalorder %s16, 3
      %p122 = por %p120, %p121
      %p123 = scmp.ne.s32.totalorder %s115, %s118
      %p124 = scmp.eq.s32.totalorder %s16, 0
      %p125 = por %p123, %p124
      %p126 = scmp.ne.s32.totalorder %s115, %s118
      %p127 = scmp.eq.s32.totalorder %s21, 3
      %p128 = por %p126, %p127
      %p129 = scmp.ne.s32.totalorder %s118, %s119
      %p130 = scmp.eq.s32.totalorder %s21, 0
      %p131 = por %p129, %p130
      %p132 = scmp.ne.s32.totalorder %s118, %s119
      %p133 = scmp.eq.s32.totalorder %s22, 3
      %p134 = por %p132, %p133
      %p136 = scmp.ne.s32.totalorder %s119, %s135
      %p137 = scmp.eq.s32.totalorder %s22, 0
      %p138 = por %p136, %p137
      %p139 = scmp.le.s32.totalorder 1, %s16
      %p140 = scmp.lt.s32.totalorder %s16, 5
      %p141 = pnand %p139, %p140
      %p142 = pneg %p141
      // Predicated region
      $region9: #{tpu_custom_call.1} parent=5 // pred_check
        _
      $region10: #{tpu_custom_call.1} parent=5 // pred_check_branch
        %144 = sbr.rel (%p141) target = $region12
      $region11: #{tpu_custom_call.1} parent=5 // pred_region
        %s145 = ssub.s32 %s16, 1
        // Predicated region
        $region13: #{tpu_custom_call.1} parent=11 // pred_check
          %p146 = pneg %p63
        $region14: #{tpu_custom_call.1} parent=11 // pred_check_branch
          %148 = sbr.rel (%p146) target = $region16
        $region15: #{tpu_custom_call.1} parent=11 // pred_region
          _
        $region16: #{tpu_custom_call.1} parent=11 // pred_fallthru
          _
        // Predicated region
        $region17: #{tpu_custom_call.1} parent=11 // pred_check
          %p149 = pneg %p84
        $region18: #{tpu_custom_call.1} parent=11 // pred_check_branch
          %151 = sbr.rel (%p149) target = $region20
        $region19: #{tpu_custom_call.1} parent=11 // pred_region
          _
        $region20: #{tpu_custom_call.1} parent=11 // pred_fallthru
          _
        // Predicated region
        $region21: #{tpu_custom_call.1} parent=11 // pred_check
          %p152 = pneg %p105
        $region22: #{tpu_custom_call.1} parent=11 // pred_check_branch
          %154 = sbr.rel (%p152) target = $region24
        $region23: #{tpu_custom_call.1} parent=11 // pred_region
          _
        $region24: #{tpu_custom_call.1} parent=11 // pred_fallthru
          _
      $region12: #{tpu_custom_call.1} parent=5 // pred_fallthru
        _
      %p155 = scmp.lt.s32.totalorder %s16, 4
      // Predicated region
      $region25: #{tpu_custom_call.1} parent=5 // pred_check
        %p156 = pneg %p155
      $region26: #{tpu_custom_call.1} parent=5 // pred_check_branch
        %158 = sbr.rel (%p156) target = $region28
      $region27: #{tpu_custom_call.1} parent=5 // pred_region
        // Predicated region
        $region29: #{tpu_custom_call.1} parent=27 // pred_check
          %p159 = pneg %p36
        $region30: #{tpu_custom_call.1} parent=27 // pred_check_branch
          %161 = sbr.rel (%p159) target = $region32
        $region31: #{tpu_custom_call.1} parent=27 // pred_region
          %s162 = sand.u32 %s26, 1
          %s163 = scalar_lea.sflag [#allocation3], %s162
          %s164 = sand.u32 %s26, 1
          %s165 = smul.addr %s164, 32
          %s166 = scalar_lea.vmem [#allocation2], %s165
          %s167 = smul.u32 4, %s16
          %s169 = ssub.s32 512, 512
          %170 = vsyncadd %s163, %s169
          %s171 = smul.addr %s167, 128
          %s172 = scalar_lea.hbm %s0, %s171
          %s174 = sshll.u32 %s166, 4
          %s175 = int_to_ptr.vmem [resolvable:$true] %s174
          %177 = dma.hbm_to_vmem [thread:$0]  %s172, 512, %s175, %s163
        $region32: #{tpu_custom_call.1} parent=27 // pred_fallthru
          _
      $region28: #{tpu_custom_call.1} parent=5 // pred_fallthru
        _
      %p178 = scmp.le.s32.totalorder 1, %s16
      %p179 = scmp.lt.s32.totalorder %s16, 5
      %p180 = pnand %p178, %p179
      %p181 = pneg %p180
      // Predicated region
      $region33: #{tpu_custom_call.1} parent=5 // pred_check
        _
      $region34: #{tpu_custom_call.1} parent=5 // pred_check_branch
        %183 = sbr.rel (%p180) target = $region36
      $region35: #{tpu_custom_call.1} parent=5 // pred_region
        %s184 = ssub.s32 %s16, 1
        %s185 = sand.u32 %s29, 1
        %s186 = scalar_lea.sflag [#allocation3], %s185
        %s187 = sand.u32 %s29, 1
        %s188 = smul.addr %s187, 32
        %s189 = scalar_lea.vmem [#allocation2], %s188
        // Predicated region
        $region37: #{tpu_custom_call.1} parent=35 // pred_check
          %p190 = pneg %p42
        $region38: #{tpu_custom_call.1} parent=35 // pred_check_branch
          %192 = sbr.rel (%p190) target = $region40
        $region39: #{tpu_custom_call.1} parent=35 // pred_region
          %193 = dma.done %s186, 512
        $region40: #{tpu_custom_call.1} parent=35 // pred_fallthru
          _
        %s194 = sand.u32 %s29, 1
        %s195 = scalar_lea.sflag [#allocation3], %s194
        %s196 = sand.u32 %s29, 1
        %s197 = smul.addr %s196, 32
        %s198 = scalar_lea.vmem [#allocation2], %s197
        %p199 = pneg %p42
        %p200 = pneg %p39
        %p201 = pneg %p63
        %p202 = pneg %p60
        %p203 = pneg %p84
        %p204 = pneg %p81
        %p205 = pneg %p105
        %p206 = pneg %p102
        %p207 = pneg %p131
        %p208 = pneg %p128
        %s209 = sand.u32 %s118, 1
        %s210 = scalar_lea.sflag [#allocation4], %s209
        %s211 = sand.u32 %s118, 1
        %s212 = smul.addr %s211, 32
        %s213 = scalar_lea.vmem [#allocation5], %s212
        %s214 = smul.u32 4, %s21
        %s215 = smul.u32 4, %s21
        %v216 = vld [vmem:[%s189] sm:$0xff]
        %v217 = vld [vmem:[%s189 + $0x8] sm:$0xff]
        %v218 = vld [vmem:[%s189 + $0x10] sm:$0xff]
        %v219 = vld [vmem:[%s189 + $0x18] sm:$0xff]
        %v220 = vld [vmem:[%s1] sm:$0xff]
        %v221 = vld [vmem:[%s1 + $0x8] sm:$0xff]
        %v222 = vld [vmem:[%s1 + $0x10] sm:$0xff]
        %v223 = vld [vmem:[%s1 + $0x18] sm:$0xff]
        %vm224 = vcmask 64512
        %v226 = vsel %vm224, %v220, 0
        %v229 = vsel %vm224, %v221, 0
        %v232 = vsel %vm224, %v222, 0
        %v235 = vsel %vm224, %v223, 0
        %237 = vmatprep.subr.mxu0 0.0
        %238 = vmatpush1.msra.mxu0 0.0
        %239 = vmatprep.subr.mxu0 0.0
        %240 = vmatpush1.msra.mxu0 0.0
        %241 = vmatprep.subr.mxu0 0.0
        %242 = vmatpush1.msra.mxu0 0.0
        %243 = vmatprep.subr.mxu0 0.0
        %244 = vmatpush1.msra.mxu0 0.0
        %245 = vmatprep.subr.mxu0 0.0
        %246 = vmatpush1.msra.mxu0 0.0
        %247 = vmatprep.subr.mxu0 0.0
        %248 = vmatpush1.msra.mxu0 0.0
        %249 = vmatprep.subr.mxu0 0.0
        %250 = vmatpush1.msra.mxu0 0.0
        %251 = vmatprep.subr.mxu0 0.0
        %252 = vmatpush1.msra.mxu0 0.0
        %253 = vmatprep.subr.mxu0 0.0
        %254 = vmatpush1.msra.mxu0 0.0
        %255 = vmatprep.subr.mxu0 0.0
        %256 = vmatpush1.msra.mxu0 0.0
        %257 = vmatprep.subr.mxu0 0.0
        %258 = vmatpush1.msra.mxu0 0.0
        %259 = vmatprep.subr.mxu0 0.0
        %260 = vmatpush1.msra.mxu0 0.0
        %261 = vmatprep.subr.mxu0 0.0
        %262 = vmatpush1.msra.mxu0 0.0
        %263 = vmatprep.subr.mxu0 0.0
        %264 = vmatpush1.msra.mxu0 0.0
        %265 = vmatprep.subr.mxu0 0.0
        %266 = vmatpush1.msra.mxu0 0.0
        %267 = vmatprep.subr.mxu0 %v217
        %268 = vmatpush1.msra.mxu0 %v216
        %269 = vmatprep.subr.mxu0 0.0
        %270 = vmatpush2.msra.mxu0 0.0
        %271 = vmatprep.subr.mxu0 0.0
        %272 = vmatpush2.msra.mxu0 0.0
        %273 = vmatprep.subr.mxu0 0.0
        %274 = vmatpush2.msra.mxu0 0.0
        %275 = vmatprep.subr.mxu0 0.0
        %276 = vmatpush2.msra.mxu0 0.0
        %277 = vmatprep.subr.mxu0 0.0
        %278 = vmatpush2.msra.mxu0 0.0
        %279 = vmatprep.subr.mxu0 0.0
        %280 = vmatpush2.msra.mxu0 0.0
        %281 = vmatprep.subr.mxu0 0.0
        %282 = vmatpush2.msra.mxu0 0.0
        %283 = vmatprep.subr.mxu0 0.0
        %284 = vmatpush2.msra.mxu0 0.0
        %285 = vmatprep.subr.mxu0 0.0
        %286 = vmatpush2.msra.mxu0 0.0
        %287 = vmatprep.subr.mxu0 0.0
        %288 = vmatpush2.msra.mxu0 0.0
        %289 = vmatprep.subr.mxu0 0.0
        %290 = vmatpush2.msra.mxu0 0.0
        %291 = vmatprep.subr.mxu0 0.0
        %292 = vmatpush2.msra.mxu0 0.0
        %293 = vmatprep.subr.mxu0 0.0
        %294 = vmatpush2.msra.mxu0 0.0
        %295 = vmatprep.subr.mxu0 0.0
        %296 = vmatpush2.msra.mxu0 0.0
        %297 = vmatprep.subr.mxu0 0.0
        %298 = vmatpush2.msra.mxu0 0.0
        %299 = vmatprep.subr.mxu0 0.0
        %300 = vmatpush2.msra.mxu0 0.0
        %301 = vmatprep.mubr.f32.mxu0 0.0
        %302 = vmatmul.mubr.f32.gmra.mxu0 %v226
        %v303 = vpop.f32.mrf.mxu0
        %v304 = vadd.f32 0.0, %v303
        %v305 = vpop.f32.mrf.mxu0
        %v306 = vadd.f32 0.0, %v305
        %307 = vmatprep.mubr.f32.mxu0 0.0
        %308 = vmatmul.mubr.f32.gmra.mxu0 %v229
        %v309 = vpop.f32.mrf.mxu0
        %v310 = vadd.f32 0.0, %v309
        %v311 = vpop.f32.mrf.mxu0
        %v312 = vadd.f32 0.0, %v311
        %313 = vmatprep.mubr.f32.mxu0 0.0
        %314 = vmatmul.mubr.f32.gmra.mxu0 %v232
        %v315 = vpop.f32.mrf.mxu0
        %v316 = vadd.f32 0.0, %v315
        %v317 = vpop.f32.mrf.mxu0
        %v318 = vadd.f32 0.0, %v317
        %319 = vmatprep.mubr.f32.mxu0 0.0
        %320 = vmatmul.mubr.f32.gmra.mxu0 %v235
        %v321 = vpop.f32.mrf.mxu0
        %v322 = vadd.f32 0.0, %v321
        %v323 = vpop.f32.mrf.mxu0
        %v324 = vadd.f32 0.0, %v323
        %325 = vdwg.mxu0
        %326 = vmatprep.subr.mxu0 0.0
        %327 = vmatpush1.msra.mxu0 0.0
        %328 = vmatprep.subr.mxu0 0.0
        %329 = vmatpush1.msra.mxu0 0.0
        %330 = vmatprep.subr.mxu0 0.0
        %331 = vmatpush1.msra.mxu0 0.0
        %332 = vmatprep.subr.mxu0 0.0
        %333 = vmatpush1.msra.mxu0 0.0
        %334 = vmatprep.subr.mxu0 0.0
        %335 = vmatpush1.msra.mxu0 0.0
        %336 = vmatprep.subr.mxu0 0.0
        %337 = vmatpush1.msra.mxu0 0.0
        %338 = vmatprep.subr.mxu0 0.0
        %339 = vmatpush1.msra.mxu0 0.0
        %340 = vmatprep.subr.mxu0 0.0
        %341 = vmatpush1.msra.mxu0 0.0
        %342 = vmatprep.subr.mxu0 0.0
        %343 = vmatpush1.msra.mxu0 0.0
        %344 = vmatprep.subr.mxu0 0.0
        %345 = vmatpush1.msra.mxu0 0.0
        %346 = vmatprep.subr.mxu0 0.0
        %347 = vmatpush1.msra.mxu0 0.0
        %348 = vmatprep.subr.mxu0 0.0
        %349 = vmatpush1.msra.mxu0 0.0
        %350 = vmatprep.subr.mxu0 0.0
        %351 = vmatpush1.msra.mxu0 0.0
        %352 = vmatprep.subr.mxu0 0.0
        %353 = vmatpush1.msra.mxu0 0.0
        %354 = vmatprep.subr.mxu0 0.0
        %355 = vmatpush1.msra.mxu0 0.0
        %356 = vmatprep.subr.mxu0 %v219
        %357 = vmatpush1.msra.mxu0 %v218
        %358 = vmatprep.subr.mxu0 0.0
        %359 = vmatpush2.msra.mxu0 0.0
        %360 = vmatprep.subr.mxu0 0.0
        %361 = vmatpush2.msra.mxu0 0.0
        %362 = vmatprep.subr.mxu0 0.0
        %363 = vmatpush2.msra.mxu0 0.0
        %364 = vmatprep.subr.mxu0 0.0
        %365 = vmatpush2.msra.mxu0 0.0
        %366 = vmatprep.subr.mxu0 0.0
        %367 = vmatpush2.msra.mxu0 0.0
        %368 = vmatprep.subr.mxu0 0.0
        %369 = vmatpush2.msra.mxu0 0.0
        %370 = vmatprep.subr.mxu0 0.0
        %371 = vmatpush2.msra.mxu0 0.0
        %372 = vmatprep.subr.mxu0 0.0
        %373 = vmatpush2.msra.mxu0 0.0
        %374 = vmatprep.subr.mxu0 0.0
        %375 = vmatpush2.msra.mxu0 0.0
        %376 = vmatprep.subr.mxu0 0.0
        %377 = vmatpush2.msra.mxu0 0.0
        %378 = vmatprep.subr.mxu0 0.0
        %379 = vmatpush2.msra.mxu0 0.0
        %380 = vmatprep.subr.mxu0 0.0
        %381 = vmatpush2.msra.mxu0 0.0
        %382 = vmatprep.subr.mxu0 0.0
        %383 = vmatpush2.msra.mxu0 0.0
        %384 = vmatprep.subr.mxu0 0.0
        %385 = vmatpush2.msra.mxu0 0.0
        %386 = vmatprep.subr.mxu0 0.0
        %387 = vmatpush2.msra.mxu0 0.0
        %388 = vmatprep.subr.mxu0 0.0
        %389 = vmatpush2.msra.mxu0 0.0
        %390 = vmatprep.mubr.f32.mxu0 0.0
        %391 = vmatmul.mubr.f32.gmra.mxu0 %v226
        %v392 = vpop.f32.mrf.mxu0
        %v393 = vadd.f32 0.0, %v392
        %v394 = vpop.f32.mrf.mxu0
        %v395 = vadd.f32 0.0, %v394
        %396 = vmatprep.mubr.f32.mxu0 0.0
        %397 = vmatmul.mubr.f32.gmra.mxu0 %v229
        %v398 = vpop.f32.mrf.mxu0
        %v399 = vadd.f32 0.0, %v398
        %v400 = vpop.f32.mrf.mxu0
        %v401 = vadd.f32 0.0, %v400
        %402 = vmatprep.mubr.f32.mxu0 0.0
        %403 = vmatmul.mubr.f32.gmra.mxu0 %v232
        %v404 = vpop.f32.mrf.mxu0
        %v405 = vadd.f32 0.0, %v404
        %v406 = vpop.f32.mrf.mxu0
        %v407 = vadd.f32 0.0, %v406
        %408 = vmatprep.mubr.f32.mxu0 0.0
        %409 = vmatmul.mubr.f32.gmra.mxu0 %v235
        %v410 = vpop.f32.mrf.mxu0
        %v411 = vadd.f32 0.0, %v410
        %v412 = vpop.f32.mrf.mxu0
        %v413 = vadd.f32 0.0, %v412
        %414 = vdwg.mxu0
        %v415 = vmax.f32 %v304, 0.0
        %v416 = vmax.f32 %v306, 0.0
        %v417 = vmax.f32 %v393, 0.0
        %v418 = vmax.f32 %v395, 0.0
        %v419 = vmax.f32 %v310, 0.0
        %v420 = vmax.f32 %v312, 0.0
        %v421 = vmax.f32 %v399, 0.0
        %v422 = vmax.f32 %v401, 0.0
        %v423 = vmax.f32 %v316, 0.0
        %v424 = vmax.f32 %v318, 0.0
        %v425 = vmax.f32 %v405, 0.0
        %v426 = vmax.f32 %v407, 0.0
        %v427 = vmax.f32 %v322, 0.0
        %v428 = vmax.f32 %v324, 0.0
        %v429 = vmax.f32 %v411, 0.0
        %v430 = vmax.f32 %v413, 0.0
        %v431 = vld [vmem:[%s2] sm:$0xff]
        %v432 = vld [vmem:[%s2 + $0x8] sm:$0xff]
        %v433 = vld [vmem:[%s2 + $0x10] sm:$0xff]
        %v434 = vld [vmem:[%s2 + $0x18] sm:$0xff]
        %vm435 = vcmask 261120
        %v437 = vsel %vm435, %v431, 0
        %v440 = vsel %vm435, %v432, 0
        %v443 = vsel %vm435, %v433, 0
        %v446 = vsel %vm435, %v434, 0
        %448 = vmatprep.subr.mxu0 0.0
        %449 = vmatpush1.msra.mxu0 0.0
        %450 = vmatprep.subr.mxu0 0.0
        %451 = vmatpush1.msra.mxu0 0.0
        %452 = vmatprep.subr.mxu0 0.0
        %453 = vmatpush1.msra.mxu0 0.0
        %454 = vmatprep.subr.mxu0 0.0
        %455 = vmatpush1.msra.mxu0 0.0
        %456 = vmatprep.subr.mxu0 0.0
        %457 = vmatpush1.msra.mxu0 0.0
        %458 = vmatprep.subr.mxu0 0.0
        %459 = vmatpush1.msra.mxu0 0.0
        %460 = vmatprep.subr.mxu0 0.0
        %461 = vmatpush1.msra.mxu0 0.0
        %462 = vmatprep.subr.mxu0 0.0
        %463 = vmatpush1.msra.mxu0 0.0
        %464 = vmatprep.subr.mxu0 0.0
        %465 = vmatpush1.msra.mxu0 0.0
        %466 = vmatprep.subr.mxu0 0.0
        %467 = vmatpush1.msra.mxu0 0.0
        %468 = vmatprep.subr.mxu0 0.0
        %469 = vmatpush1.msra.mxu0 0.0
        %470 = vmatprep.subr.mxu0 0.0
        %471 = vmatpush1.msra.mxu0 0.0
        %472 = vmatprep.subr.mxu0 %v428
        %473 = vmatpush1.msra.mxu0 %v427
        %474 = vmatprep.subr.mxu0 %v424
        %475 = vmatpush1.msra.mxu0 %v423
        %476 = vmatprep.subr.mxu0 %v420
        %477 = vmatpush1.msra.mxu0 %v419
        %478 = vmatprep.subr.mxu0 %v416
        %479 = vmatpush1.msra.mxu0 %v415
        %480 = vmatprep.subr.mxu0 0.0
        %481 = vmatpush2.msra.mxu0 0.0
        %482 = vmatprep.subr.mxu0 0.0
        %483 = vmatpush2.msra.mxu0 0.0
        %484 = vmatprep.subr.mxu0 0.0
        %485 = vmatpush2.msra.mxu0 0.0
        %486 = vmatprep.subr.mxu0 0.0
        %487 = vmatpush2.msra.mxu0 0.0
        %488 = vmatprep.subr.mxu0 0.0
        %489 = vmatpush2.msra.mxu0 0.0
        %490 = vmatprep.subr.mxu0 0.0
        %491 = vmatpush2.msra.mxu0 0.0
        %492 = vmatprep.subr.mxu0 0.0
        %493 = vmatpush2.msra.mxu0 0.0
        %494 = vmatprep.subr.mxu0 0.0
        %495 = vmatpush2.msra.mxu0 0.0
        %496 = vmatprep.subr.mxu0 0.0
        %497 = vmatpush2.msra.mxu0 0.0
        %498 = vmatprep.subr.mxu0 0.0
        %499 = vmatpush2.msra.mxu0 0.0
        %500 = vmatprep.subr.mxu0 0.0
        %501 = vmatpush2.msra.mxu0 0.0
        %502 = vmatprep.subr.mxu0 0.0
        %503 = vmatpush2.msra.mxu0 0.0
        %504 = vmatprep.subr.mxu0 0.0
        %505 = vmatpush2.msra.mxu0 0.0
        %506 = vmatprep.subr.mxu0 0.0
        %507 = vmatpush2.msra.mxu0 0.0
        %508 = vmatprep.subr.mxu0 0.0
        %509 = vmatpush2.msra.mxu0 0.0
        %510 = vmatprep.subr.mxu0 0.0
        %511 = vmatpush2.msra.mxu0 0.0
        %512 = vmatprep.mubr.f32.mxu0 0.0
        %513 = vmatmul.mubr.f32.gmra.mxu0 %v437
        %v514 = vpop.f32.mrf.mxu0
        %v515 = vadd.f32 0.0, %v514
        %v516 = vpop.f32.mrf.mxu0
        %v517 = vadd.f32 0.0, %v516
        %518 = vmatprep.mubr.f32.mxu0 0.0
        %519 = vmatmul.mubr.f32.gmra.mxu0 %v440
        %v520 = vpop.f32.mrf.mxu0
        %v521 = vadd.f32 0.0, %v520
        %v522 = vpop.f32.mrf.mxu0
        %v523 = vadd.f32 0.0, %v522
        %524 = vmatprep.mubr.f32.mxu0 0.0
        %525 = vmatmul.mubr.f32.gmra.mxu0 %v443
        %v526 = vpop.f32.mrf.mxu0
        %v527 = vadd.f32 0.0, %v526
        %v528 = vpop.f32.mrf.mxu0
        %v529 = vadd.f32 0.0, %v528
        %530 = vmatprep.mubr.f32.mxu0 0.0
        %531 = vmatmul.mubr.f32.gmra.mxu0 %v446
        %v532 = vpop.f32.mrf.mxu0
        %v533 = vadd.f32 0.0, %v532
        %v534 = vpop.f32.mrf.mxu0
        %v535 = vadd.f32 0.0, %v534
        %536 = vdwg.mxu0
        %537 = vmatprep.subr.mxu0 0.0
        %538 = vmatpush1.msra.mxu0 0.0
        %539 = vmatprep.subr.mxu0 0.0
        %540 = vmatpush1.msra.mxu0 0.0
        %541 = vmatprep.subr.mxu0 0.0
        %542 = vmatpush1.msra.mxu0 0.0
        %543 = vmatprep.subr.mxu0 0.0
        %544 = vmatpush1.msra.mxu0 0.0
        %545 = vmatprep.subr.mxu0 0.0
        %546 = vmatpush1.msra.mxu0 0.0
        %547 = vmatprep.subr.mxu0 0.0
        %548 = vmatpush1.msra.mxu0 0.0
        %549 = vmatprep.subr.mxu0 0.0
        %550 = vmatpush1.msra.mxu0 0.0
        %551 = vmatprep.subr.mxu0 0.0
        %552 = vmatpush1.msra.mxu0 0.0
        %553 = vmatprep.subr.mxu0 0.0
        %554 = vmatpush1.msra.mxu0 0.0
        %555 = vmatprep.subr.mxu0 0.0
        %556 = vmatpush1.msra.mxu0 0.0
        %557 = vmatprep.subr.mxu0 0.0
        %558 = vmatpush1.msra.mxu0 0.0
        %559 = vmatprep.subr.mxu0 0.0
        %560 = vmatpush1.msra.mxu0 0.0
        %561 = vmatprep.subr.mxu0 %v430
        %562 = vmatpush1.msra.mxu0 %v429
        %563 = vmatprep.subr.mxu0 %v426
        %564 = vmatpush1.msra.mxu0 %v425
        %565 = vmatprep.subr.mxu0 %v422
        %566 = vmatpush1.msra.mxu0 %v421
        %567 = vmatprep.subr.mxu0 %v418
        %568 = vmatpush1.msra.mxu0 %v417
        %569 = vmatprep.subr.mxu0 0.0
        %570 = vmatpush2.msra.mxu0 0.0
        %571 = vmatprep.subr.mxu0 0.0
        %572 = vmatpush2.msra.mxu0 0.0
        %573 = vmatprep.subr.mxu0 0.0
        %574 = vmatpush2.msra.mxu0 0.0
        %575 = vmatprep.subr.mxu0 0.0
        %576 = vmatpush2.msra.mxu0 0.0
        %577 = vmatprep.subr.mxu0 0.0
        %578 = vmatpush2.msra.mxu0 0.0
        %579 = vmatprep.subr.mxu0 0.0
        %580 = vmatpush2.msra.mxu0 0.0
        %581 = vmatprep.subr.mxu0 0.0
        %582 = vmatpush2.msra.mxu0 0.0
        %583 = vmatprep.subr.mxu0 0.0
        %584 = vmatpush2.msra.mxu0 0.0
        %585 = vmatprep.subr.mxu0 0.0
        %586 = vmatpush2.msra.mxu0 0.0
        %587 = vmatprep.subr.mxu0 0.0
        %588 = vmatpush2.msra.mxu0 0.0
        %589 = vmatprep.subr.mxu0 0.0
        %590 = vmatpush2.msra.mxu0 0.0
        %591 = vmatprep.subr.mxu0 0.0
        %592 = vmatpush2.msra.mxu0 0.0
        %593 = vmatprep.subr.mxu0 0.0
        %594 = vmatpush2.msra.mxu0 0.0
        %595 = vmatprep.subr.mxu0 0.0
        %596 = vmatpush2.msra.mxu0 0.0
        %597 = vmatprep.subr.mxu0 0.0
        %598 = vmatpush2.msra.mxu0 0.0
        %599 = vmatprep.subr.mxu0 0.0
        %600 = vmatpush2.msra.mxu0 0.0
        %601 = vmatprep.mubr.f32.mxu0 0.0
        %602 = vmatmul.mubr.f32.gmra.mxu0 %v437
        %v603 = vpop.f32.mrf.mxu0
        %v604 = vadd.f32 0.0, %v603
        %v605 = vpop.f32.mrf.mxu0
        %v606 = vadd.f32 0.0, %v605
        %607 = vmatprep.mubr.f32.mxu0 0.0
        %608 = vmatmul.mubr.f32.gmra.mxu0 %v440
        %v609 = vpop.f32.mrf.mxu0
        %v610 = vadd.f32 0.0, %v609
        %v611 = vpop.f32.mrf.mxu0
        %v612 = vadd.f32 0.0, %v611
        %613 = vmatprep.mubr.f32.mxu0 0.0
        %614 = vmatmul.mubr.f32.gmra.mxu0 %v443
        %v615 = vpop.f32.mrf.mxu0
        %v616 = vadd.f32 0.0, %v615
        %v617 = vpop.f32.mrf.mxu0
        %v618 = vadd.f32 0.0, %v617
        %619 = vmatprep.mubr.f32.mxu0 0.0
        %620 = vmatmul.mubr.f32.gmra.mxu0 %v446
        %v621 = vpop.f32.mrf.mxu0
        %v622 = vadd.f32 0.0, %v621
        %v623 = vpop.f32.mrf.mxu0
        %v624 = vadd.f32 0.0, %v623
        %625 = vdwg.mxu0
        %v626 = vmax.f32 %v515, 0.0
        %v627 = vmax.f32 %v517, 0.0
        %v628 = vmax.f32 %v604, 0.0
        %v629 = vmax.f32 %v606, 0.0
        %v630 = vmax.f32 %v521, 0.0
        %v631 = vmax.f32 %v523, 0.0
        %v632 = vmax.f32 %v610, 0.0
        %v633 = vmax.f32 %v612, 0.0
        %v634 = vmax.f32 %v527, 0.0
        %v635 = vmax.f32 %v529, 0.0
        %v636 = vmax.f32 %v616, 0.0
        %v637 = vmax.f32 %v618, 0.0
        %v638 = vmax.f32 %v533, 0.0
        %v639 = vmax.f32 %v535, 0.0
        %v640 = vmax.f32 %v622, 0.0
        %v641 = vmax.f32 %v624, 0.0
        %v642 = vld [vmem:[%s3] sm:$0xff]
        %v644 = vsel %vm435, %v642, 0
        %646 = vmatprep.subr.mxu0 0.0
        %647 = vmatpush1.msra.mxu0 0.0
        %648 = vmatprep.subr.mxu0 0.0
        %649 = vmatpush1.msra.mxu0 0.0
        %650 = vmatprep.subr.mxu0 0.0
        %651 = vmatpush1.msra.mxu0 0.0
        %652 = vmatprep.subr.mxu0 0.0
        %653 = vmatpush1.msra.mxu0 0.0
        %654 = vmatprep.subr.mxu0 0.0
        %655 = vmatpush1.msra.mxu0 0.0
        %656 = vmatprep.subr.mxu0 0.0
        %657 = vmatpush1.msra.mxu0 0.0
        %658 = vmatprep.subr.mxu0 0.0
        %659 = vmatpush1.msra.mxu0 0.0
        %660 = vmatprep.subr.mxu0 0.0
        %661 = vmatpush1.msra.mxu0 0.0
        %662 = vmatprep.subr.mxu0 0.0
        %663 = vmatpush1.msra.mxu0 0.0
        %664 = vmatprep.subr.mxu0 0.0
        %665 = vmatpush1.msra.mxu0 0.0
        %666 = vmatprep.subr.mxu0 0.0
        %667 = vmatpush1.msra.mxu0 0.0
        %668 = vmatprep.subr.mxu0 0.0
        %669 = vmatpush1.msra.mxu0 0.0
        %670 = vmatprep.subr.mxu0 %v639
        %671 = vmatpush1.msra.mxu0 %v638
        %672 = vmatprep.subr.mxu0 %v635
        %673 = vmatpush1.msra.mxu0 %v634
        %674 = vmatprep.subr.mxu0 %v631
        %675 = vmatpush1.msra.mxu0 %v630
        %676 = vmatprep.subr.mxu0 %v627
        %677 = vmatpush1.msra.mxu0 %v626
        %678 = vmatprep.subr.mxu0 0.0
        %679 = vmatpush2.msra.mxu0 0.0
        %680 = vmatprep.subr.mxu0 0.0
        %681 = vmatpush2.msra.mxu0 0.0
        %682 = vmatprep.subr.mxu0 0.0
        %683 = vmatpush2.msra.mxu0 0.0
        %684 = vmatprep.subr.mxu0 0.0
        %685 = vmatpush2.msra.mxu0 0.0
        %686 = vmatprep.subr.mxu0 0.0
        %687 = vmatpush2.msra.mxu0 0.0
        %688 = vmatprep.subr.mxu0 0.0
        %689 = vmatpush2.msra.mxu0 0.0
        %690 = vmatprep.subr.mxu0 0.0
        %691 = vmatpush2.msra.mxu0 0.0
        %692 = vmatprep.subr.mxu0 0.0
        %693 = vmatpush2.msra.mxu0 0.0
        %694 = vmatprep.subr.mxu0 0.0
        %695 = vmatpush2.msra.mxu0 0.0
        %696 = vmatprep.subr.mxu0 0.0
        %697 = vmatpush2.msra.mxu0 0.0
        %698 = vmatprep.subr.mxu0 0.0
        %699 = vmatpush2.msra.mxu0 0.0
        %700 = vmatprep.subr.mxu0 0.0
        %701 = vmatpush2.msra.mxu0 0.0
        %702 = vmatprep.subr.mxu0 0.0
        %703 = vmatpush2.msra.mxu0 0.0
        %704 = vmatprep.subr.mxu0 0.0
        %705 = vmatpush2.msra.mxu0 0.0
        %706 = vmatprep.subr.mxu0 0.0
        %707 = vmatpush2.msra.mxu0 0.0
        %708 = vmatprep.subr.mxu0 0.0
        %709 = vmatpush2.msra.mxu0 0.0
        %710 = vmatprep.mubr.f32.mxu0 0.0
        %711 = vmatmul.mubr.f32.gmra.mxu0 %v644
        %v712 = vpop.f32.mrf.mxu0
        %v713 = vadd.f32 0.0, %v712
        %v714 = vpop.f32.mrf.mxu0
        %v715 = vadd.f32 0.0, %v714
        %716 = vdwg.mxu0
        %717 = vmatprep.subr.mxu0 0.0
        %718 = vmatpush1.msra.mxu0 0.0
        %719 = vmatprep.subr.mxu0 0.0
        %720 = vmatpush1.msra.mxu0 0.0
        %721 = vmatprep.subr.mxu0 0.0
        %722 = vmatpush1.msra.mxu0 0.0
        %723 = vmatprep.subr.mxu0 0.0
        %724 = vmatpush1.msra.mxu0 0.0
        %725 = vmatprep.subr.mxu0 0.0
        %726 = vmatpush1.msra.mxu0 0.0
        %727 = vmatprep.subr.mxu0 0.0
        %728 = vmatpush1.msra.mxu0 0.0
        %729 = vmatprep.subr.mxu0 0.0
        %730 = vmatpush1.msra.mxu0 0.0
        %731 = vmatprep.subr.mxu0 0.0
        %732 = vmatpush1.msra.mxu0 0.0
        %733 = vmatprep.subr.mxu0 0.0
        %734 = vmatpush1.msra.mxu0 0.0
        %735 = vmatprep.subr.mxu0 0.0
        %736 = vmatpush1.msra.mxu0 0.0
        %737 = vmatprep.subr.mxu0 0.0
        %738 = vmatpush1.msra.mxu0 0.0
        %739 = vmatprep.subr.mxu0 0.0
        %740 = vmatpush1.msra.mxu0 0.0
        %741 = vmatprep.subr.mxu0 %v641
        %742 = vmatpush1.msra.mxu0 %v640
        %743 = vmatprep.subr.mxu0 %v637
        %744 = vmatpush1.msra.mxu0 %v636
        %745 = vmatprep.subr.mxu0 %v633
        %746 = vmatpush1.msra.mxu0 %v632
        %747 = vmatprep.subr.mxu0 %v629
        %748 = vmatpush1.msra.mxu0 %v628
        %749 = vmatprep.subr.mxu0 0.0
        %750 = vmatpush2.msra.mxu0 0.0
        %751 = vmatprep.subr.mxu0 0.0
        %752 = vmatpush2.msra.mxu0 0.0
        %753 = vmatprep.subr.mxu0 0.0
        %754 = vmatpush2.msra.mxu0 0.0
        %755 = vmatprep.subr.mxu0 0.0
        %756 = vmatpush2.msra.mxu0 0.0
        %757 = vmatprep.subr.mxu0 0.0
        %758 = vmatpush2.msra.mxu0 0.0
        %759 = vmatprep.subr.mxu0 0.0
        %760 = vmatpush2.msra.mxu0 0.0
        %761 = vmatprep.subr.mxu0 0.0
        %762 = vmatpush2.msra.mxu0 0.0
        %763 = vmatprep.subr.mxu0 0.0
        %764 = vmatpush2.msra.mxu0 0.0
        %765 = vmatprep.subr.mxu0 0.0
        %766 = vmatpush2.msra.mxu0 0.0
        %767 = vmatprep.subr.mxu0 0.0
        %768 = vmatpush2.msra.mxu0 0.0
        %769 = vmatprep.subr.mxu0 0.0
        %770 = vmatpush2.msra.mxu0 0.0
        %771 = vmatprep.subr.mxu0 0.0
        %772 = vmatpush2.msra.mxu0 0.0
        %773 = vmatprep.subr.mxu0 0.0
        %774 = vmatpush2.msra.mxu0 0.0
        %775 = vmatprep.subr.mxu0 0.0
        %776 = vmatpush2.msra.mxu0 0.0
        %777 = vmatprep.subr.mxu0 0.0
        %778 = vmatpush2.msra.mxu0 0.0
        %779 = vmatprep.subr.mxu0 0.0
        %780 = vmatpush2.msra.mxu0 0.0
        %781 = vmatprep.mubr.f32.mxu0 0.0
        %782 = vmatmul.mubr.f32.gmra.mxu0 %v644
        %v783 = vpop.f32.mrf.mxu0
        %v784 = vadd.f32 0.0, %v783
        %v785 = vpop.f32.mrf.mxu0
        %v786 = vadd.f32 0.0, %v785
        %787 = vdwg.mxu0
        %788 = vst [vmem:[%s213] sm:$0xff] %v713
        %789 = vst [vmem:[%s213 + $0x8] sm:$0xff] %v715
        %790 = vst [vmem:[%s213 + $0x10] sm:$0xff] %v784
        %791 = vst [vmem:[%s213 + $0x18] sm:$0xff] %v786
        %s792 = sand.u32 %s118, 1
        %s793 = scalar_lea.sflag [#allocation4], %s792
        %s794 = sand.u32 %s118, 1
        %s795 = smul.addr %s794, 32
        %s796 = scalar_lea.vmem [#allocation5], %s795
        // Predicated region
        $region41: #{tpu_custom_call.1} parent=35 // pred_check
          %p797 = pneg %p128
        $region42: #{tpu_custom_call.1} parent=35 // pred_check_branch
          %799 = sbr.rel (%p797) target = $region44
        $region43: #{tpu_custom_call.1} parent=35 // pred_region
          %s800 = smul.u32 4, %s21
          %s802 = ssub.s32 512, 512
          %803 = vsyncadd %s793, %s802
          %s804 = smul.addr %s800, 128
          %s805 = scalar_lea.hbm %s4, %s804
          %s807 = sshll.u32 %s796, 4
          %s808 = int_to_ptr.vmem [resolvable:$true] %s807
          %810 = dma.vmem_to_hbm [thread:$0]  %s808, 512, %s805, %s793
        $region44: #{tpu_custom_call.1} parent=35 // pred_fallthru
          _
      $region36: #{tpu_custom_call.1} parent=5 // pred_fallthru
        _
      %p811 = scmp.le.s32.totalorder 2, %s16
      // Predicated region
      $region45: #{tpu_custom_call.1} parent=5 // pred_check
        %p812 = pneg %p811
      $region46: #{tpu_custom_call.1} parent=5 // pred_check_branch
        %814 = sbr.rel (%p812) target = $region48
      $region47: #{tpu_custom_call.1} parent=5 // pred_region
        %s815 = ssub.s32 %s16, 2
        // Predicated region
        $region49: #{tpu_custom_call.1} parent=47 // pred_check
          %p816 = pneg %p134
        $region50: #{tpu_custom_call.1} parent=47 // pred_check_branch
          %818 = sbr.rel (%p816) target = $region52
        $region51: #{tpu_custom_call.1} parent=47 // pred_region
          %s819 = sand.u32 %s119, 1
          %s820 = scalar_lea.sflag [#allocation4], %s819
          %s821 = sand.u32 %s119, 1
          %s822 = smul.addr %s821, 32
          %s823 = scalar_lea.vmem [#allocation5], %s822
          %824 = dma.done %s820, 512
        $region52: #{tpu_custom_call.1} parent=47 // pred_fallthru
          _
      $region48: #{tpu_custom_call.1} parent=5 // pred_fallthru
        _
    $region6: #{tpu_custom_call.1} parent=1 // loop_footer
      %s20 = sadd.s32 1, %s16
    $region7: #{tpu_custom_call.1} parent=1 // loop_footer_branch
      %15 = sbr.rel target = $region3
    $region8: #{tpu_custom_call.1} parent=1 // loop_exit
      _
    %825 = vsyncpa [#allocation3], 1
    %s826 = scalar_lea.sflag [#allocation3], 1
    %827 = vsyncpa %s826, 1
    %828 = vsyncpa [#allocation4], 1
    %s829 = scalar_lea.sflag [#allocation4], 1
    %830 = vsyncpa %s829, 1

</llo_original>
